<compile_context>
chip_gen: v7x
topology: tpu7x:2x2x1
jax: 0.10.0
libtpu: 0.0.40
codegen_flags: <defaults>
</compile_context>

<pallas_src>
import functools
import math

import jax
import jax.numpy as jnp
from jax import lax
from jax.experimental import pallas as pl
from jax.experimental.pallas import tpu as pltpu


# ---------------------------------------------------------------------------
# Kernel: fused row-wise LayerNormalisation (the reference's quirky variant)
# ---------------------------------------------------------------------------
def layernorm_kernel(alpha_ref, bias_ref, x_ref, o_ref, *, eps):
    """One grid step normalises a (row_tile, D) block of rows.

    alpha_ref / bias_ref : (1,) f32 scalars in SMEM
    x_ref / o_ref        : (row_tile, D) f32 blocks in VMEM
    """
    x = x_ref[...]                                      # (TR, D) f32
    d = x.shape[-1]

    # mean over the feature axis
    mean = jnp.mean(x, axis=-1, keepdims=True)          # (TR, 1)
    xc = x - mean

    # torch.std default is unbiased (divide by N-1)
    var = jnp.sum(xc * xc, axis=-1, keepdims=True) / (d - 1)
    std = jnp.sqrt(var)

    # faithful to the reference:  (x - mean) / sqrt(std + eps)
    inv = lax.rsqrt(std + eps)                          # EUP, not a VPU divide

    alpha = alpha_ref[0]
    bias = bias_ref[0]
    o_ref[...] = alpha * (xc * inv) + bias


def pallas_layer_norm(x, alpha, bias, eps=1e-6):
    """Apply the reference LayerNormalisation over the last axis of `x`."""
    orig_shape = x.shape
    orig_dtype = x.dtype
    d = orig_shape[-1]
    x2 = x.reshape(-1, d).astype(jnp.float32)
    rows = x2.shape[0]

    # Largest sublane-aligned row tile that divides the row count; fall back to
    # the full extent (full-array block dims are always legal).
    row_tile = rows
    for t in (1024, 512, 256, 128, 64, 32, 16, 8):
        if rows % t == 0:
            row_tile = t
            break
    grid = (rows // row_tile,)

    alpha1 = jnp.asarray(alpha, jnp.float32).reshape(1)
    bias1 = jnp.asarray(bias, jnp.float32).reshape(1)

    scalar_spec = pl.BlockSpec(memory_space=pltpu.MemorySpace.SMEM)
    x_spec = pl.BlockSpec((row_tile, d), lambda i: (i, 0))

    out = pl.pallas_call(
        functools.partial(layernorm_kernel, eps=eps),
        out_shape=jax.ShapeDtypeStruct((rows, d), jnp.float32),
        grid_spec=pltpu.PrefetchScalarGridSpec(
            num_scalar_prefetch=0,
            grid=grid,
            in_specs=[scalar_spec, scalar_spec, x_spec],
            out_specs=x_spec,
        ),
        compiler_params=pltpu.CompilerParams(
            dimension_semantics=("parallel",)),
    )(alpha1, bias1, x2)

    return out.reshape(orig_shape).astype(orig_dtype)


# ---------------------------------------------------------------------------
# Decoder forward: opaque layer stack + Pallas layer-norm
# ---------------------------------------------------------------------------
def decoder_forward(x, encoder_output, src_mask, tgt_mask, layers,
                    alpha, bias, eps=1e-6):
    """Mirrors Decoder.forward: run every layer, then the final norm."""
    for layer in layers:
        x = layer(x, encoder_output, src_mask, tgt_mask)
    return pallas_layer_norm(x, alpha, bias, eps)


# ---------------------------------------------------------------------------
# Pure-JAX reference (matches the PyTorch module semantics)
# ---------------------------------------------------------------------------
def reference_layer_norm(x, alpha, bias, eps=1e-6):
    mean = jnp.mean(x, axis=-1, keepdims=True)
    std = jnp.std(x, axis=-1, keepdims=True, ddof=1)     # torch unbiased std
    return alpha * (x - mean) / jnp.sqrt(std + eps) + bias


def reference_decoder(x, encoder_output, src_mask, tgt_mask, layers,
                      alpha, bias, eps=1e-6):
    for layer in layers:
        x = layer(x, encoder_output, src_mask, tgt_mask)
    return reference_layer_norm(x, alpha, bias, eps)


# ---------------------------------------------------------------------------
# Demo / self-test
# ---------------------------------------------------------------------------
if __name__ == "__main__":
    B, S, D = 2, 8, 32

    key = jax.random.PRNGKey(0)
    kx, ke, k1, k2 = jax.random.split(key, 4)

    x = jax.random.normal(kx, (B, S, D), jnp.float32)
    encoder_output = jax.random.normal(ke, (B, S, D), jnp.float32)
    src_mask = jnp.ones((B, 1, 1, S), jnp.float32)
    tgt_mask = jnp.tril(jnp.ones((S, S), jnp.float32))

    # Two simple deterministic stand-in decoder layers (the spec's `layers`
    # are arbitrary modules supplied from outside the Decoder).
    w1 = 0.05 * jax.random.normal(k1, (D, D), jnp.float32)
    w2 = 0.05 * jax.random.normal(k2, (D, D), jnp.float32)

    def layer1(h, enc, sm, tm):
        return h + jnp.tanh(h @ w1)

    def layer2(h, enc, sm, tm):
        return h + jnp.tanh(enc @ w2)

    layers = [layer1, layer2]

    # LayerNormalisation parameters: nn.Parameter(torch.ones(1)) for both.
    alpha = jnp.ones((1,), jnp.float32)
    bias = jnp.ones((1,), jnp.float32)

    out = decoder_forward(x, encoder_output, src_mask, tgt_mask,
                          layers, alpha, bias)
    out = jax.block_until_ready(out)

    ref = reference_decoder(x, encoder_output, src_mask, tgt_mask,
                            layers, alpha, bias)

    assert out.shape == (B, S, D)
    assert jnp.allclose(out, ref, atol=1e-4, rtol=1e-4), "mismatch vs reference"
    print("KERNEL_OK")
</pallas_src>

<mosaic_0001>
module attributes {stable_mosaic.version = 11 : i64} {
  func.func @layernorm_kernel(%arg0: i32, %arg1: memref<1xf32, #tpu.memory_space<smem>>, %arg2: memref<1xf32, #tpu.memory_space<smem>>, %arg3: memref<16x32xf32, #tpu.memory_space<vmem>>, %arg4: memref<16x32xf32, #tpu.memory_space<vmem>>) attributes {dimension_semantics = [#tpu.dimension_semantics<parallel>], iteration_bounds = array<i64: 1>, scalar_prefetch = 0 : i64, scratch_operands = 0 : i64, tpu.core_type = #tpu.core_type<tc>, window_params = [{transform_indices = @transform_0, window_bounds = array<i64: 1>}, {transform_indices = @transform_1, window_bounds = array<i64: 1>}, {transform_indices = @transform_2, window_bounds = array<i64: 16, 32>}, {transform_indices = @transform_3, window_bounds = array<i64: 16, 32>}]} {
    %c0 = arith.constant 0 : index
    %c0_0 = arith.constant 0 : index
    %0 = vector.load %arg3[%c0, %c0_0] : memref<16x32xf32, #tpu.memory_space<vmem>>, vector<16x32xf32>
    %cst = arith.constant dense<0.000000e+00> : vector<16xf32>
    %1 = vector.multi_reduction <add>, %0, %cst [1] : vector<16x32xf32> to vector<16xf32>
    %2 = vector.shape_cast %1 : vector<16xf32> to vector<16x1xf32>
    %cst_1 = arith.constant 3.200000e+01 : f32
    %3 = vector.broadcast %cst_1 : f32 to vector<16x1xf32>
    %4 = arith.divf %2, %3 : vector<16x1xf32>
    %5 = vector.broadcast %4 : vector<16x1xf32> to vector<16x32xf32>
    %6 = arith.subf %0, %5 : vector<16x32xf32>
    %7 = arith.mulf %6, %6 : vector<16x32xf32>
    %cst_2 = arith.constant dense<0.000000e+00> : vector<16xf32>
    %8 = vector.multi_reduction <add>, %7, %cst_2 [1] : vector<16x32xf32> to vector<16xf32>
    %9 = vector.shape_cast %8 : vector<16xf32> to vector<16x1xf32>
    %cst_3 = arith.constant 3.100000e+01 : f32
    %10 = vector.broadcast %cst_3 : f32 to vector<16x1xf32>
    %11 = arith.divf %9, %10 : vector<16x1xf32>
    %12 = math.sqrt %11 : vector<16x1xf32>
    %cst_4 = arith.constant 9.99999997E-7 : f32
    %13 = vector.broadcast %cst_4 : f32 to vector<16x1xf32>
    %14 = arith.addf %12, %13 : vector<16x1xf32>
    %15 = math.rsqrt %14 : vector<16x1xf32>
    %c0_5 = arith.constant 0 : index
    %16 = memref.load %arg1[%c0_5] : memref<1xf32, #tpu.memory_space<smem>>
    %c0_6 = arith.constant 0 : index
    %17 = memref.load %arg2[%c0_6] : memref<1xf32, #tpu.memory_space<smem>>
    %18 = vector.broadcast %15 : vector<16x1xf32> to vector<16x32xf32>
    %19 = arith.mulf %6, %18 : vector<16x32xf32>
    %20 = vector.broadcast %16 : f32 to vector<16x32xf32>
    %21 = arith.mulf %20, %19 : vector<16x32xf32>
    %22 = vector.broadcast %17 : f32 to vector<16x32xf32>
    %23 = arith.addf %21, %22 : vector<16x32xf32>
    %c0_7 = arith.constant 0 : index
    %c0_8 = arith.constant 0 : index
    %24 = vector.load %arg4[%c0_7, %c0_8] : memref<16x32xf32, #tpu.memory_space<vmem>>, vector<16x32xf32>
    tpu.vector_store %arg4[%c0_7, %c0_8], %23 {strides = array<i32>} : memref<16x32xf32, #tpu.memory_space<vmem>>, vector<16x32xf32>,
    return
  }
  func.func @transform_0(%arg0: i32) -> i32 {
    %c0_i32 = arith.constant 0 : i32
    %c0_i32_0 = arith.constant 0 : i32
    return %c0_i32 : i32
  }
  func.func @transform_1(%arg0: i32) -> i32 {
    %c0_i32 = arith.constant 0 : i32
    %c0_i32_0 = arith.constant 0 : i32
    return %c0_i32 : i32
  }
  func.func @transform_2(%arg0: i32) -> (i32, i32) {
    %c0_i32 = arith.constant 0 : i32
    %c0_i32_0 = arith.constant 0 : i32
    return %arg0, %c0_i32 : i32, i32
  }
  func.func @transform_3(%arg0: i32) -> (i32, i32) {
    %c0_i32 = arith.constant 0 : i32
    %c0_i32_0 = arith.constant 0 : i32
    return %arg0, %c0_i32 : i32, i32
  }
}

</mosaic_0001>

<llo_original>
// kernel: tpu_custom_call.1
$region0: #{tpu_custom_call.1}
  #allocation0 [shape = 'u32[]', space=smem, size = 0x4, offset = 0x4, fixed_abs, tag = 'smem constant byte address 0x4 - core index']
  #allocation1 [shape = 'u32[144,128]{1,0:T(1,128)}', space=vmem, size = 0x12000, scoped, tag = 'internal scratch']
  #allocation2 [shape = 'f32[1]{0:T(128)S(6)}', space=smem, size = 0x200, scoped, tag = 'scoped memory for tpu_custom_call.1']
  #allocation3 [shape = 'f32[1]{0:T(128)S(6)}', space=smem, size = 0x200, scoped, tag = 'scoped memory for tpu_custom_call.1']
  %s0 = inlined_call_operand.<no memory space> [shape: f32[1], index: 0, kind: input, shape index: {}]
  %s1 = inlined_call_operand.<no memory space> [shape: f32[1], index: 1, kind: input, shape index: {}]
  %s2 = inlined_call_operand.hbm [shape: f32[16,32], index: 2, kind: input, shape index: {}]
  %s3 = inlined_call_operand.hbm [shape: f32[16,32], index: 3, kind: output, shape index: {}]
  %s4 = sld [smem:[#allocation0]]
  $region26: #{tpu_custom_call.1} parent=0
    _
  %s6 = ssub.s32 1, %s4
  %s7 = scalar_select 0, %s6, %s4
  %8 = sst [smem:[#allocation2]] %s0
  %9 = sst [smem:[#allocation3]] %s1
  $region1: #{tpu_custom_call.1} parent=0
    #allocation4 [shape = 'u8[8192]{0}', space=vmem, size = 0x2000, scoped, tag = 'input window, operand 2, single buffered']
    #allocation5 [shape = 's32[1]{0}', space=sflag, size = 0x4, scoped, tag = 'scoped memory for tpu_custom_call.1']
    #allocation6 [shape = 's32[1]{0}', space=sflag, size = 0x4, scoped, tag = 'scoped memory for tpu_custom_call.1']
    #allocation7 [shape = 'u8[8192]{0}', space=vmem, size = 0x2000, scoped, tag = 'output window, operand 0, single buffered']
    %10 = vsyncpa [#allocation5], 0
    %11 = vsyncpa [#allocation6], 0
    // Predicated region
    $region2: #{tpu_custom_call.1} parent=1 // pred_check
      _
    $region3: #{tpu_custom_call.1} parent=1 // pred_check_branch
      %13 = sbr.rel (0) target = $region5
    $region4: #{tpu_custom_call.1} parent=1 // pred_region
      _
    $region5: #{tpu_custom_call.1} parent=1 // pred_fallthru
      _
    // Predicated region
    $region6: #{tpu_custom_call.1} parent=1 // pred_check
      _
    $region7: #{tpu_custom_call.1} parent=1 // pred_check_branch
      %15 = sbr.rel (0) target = $region9
    $region8: #{tpu_custom_call.1} parent=1 // pred_region
      _
    $region9: #{tpu_custom_call.1} parent=1 // pred_fallthru
      _
    // Predicated region
    $region10: #{tpu_custom_call.1} parent=1 // pred_check
      _
    $region11: #{tpu_custom_call.1} parent=1 // pred_check_branch
      %17 = sbr.rel (0) target = $region13
    $region12: #{tpu_custom_call.1} parent=1 // pred_region
      %s19 = ssub.s32 256, 256
      %20 = vsyncadd [#allocation5], %s19
      %s21 = sshll.u32 [#allocation4], 4
      %s22 = int_to_ptr.vmem [resolvable:$true] %s21
      %27 = dma.hbm_to_vmem [thread:$0]  %s2, 256, %s22, [#allocation5], 128, 128, 8
    $region13: #{tpu_custom_call.1} parent=1 // pred_fallthru
      _
    // Predicated region
    $region14: #{tpu_custom_call.1} parent=1 // pred_check
      _
    $region15: #{tpu_custom_call.1} parent=1 // pred_check_branch
      %29 = sbr.rel (0) target = $region17
    $region16: #{tpu_custom_call.1} parent=1 // pred_region
      %30 = dma.done [#allocation5], 256
    $region17: #{tpu_custom_call.1} parent=1 // pred_fallthru
      _
    %v31 = vld [vmem:[#allocation4] sm:$0xff]
    %v32 = vld [vmem:[#allocation4 + $0x8] sm:$0xff]
    %vm33 = vcmask 261120
    %v34 = vsel %vm33, %v31, 0.0
    %35 = vadd.xlane.f32.xlu0 %v34
    %v36 = vpop.xlane.xlu0 %35
    %v37 = vsel %vm33, %v32, 0.0
    %38 = vadd.xlane.f32.xlu0 %v37
    %v39 = vpop.xlane.xlu0 %38
    %v40 = vrcp.pop 32.0
    %v41 = vmul.f32 %v36, %v40
    %v42 = vmul.f32 %v39, %v40
    %v43 = vsub.f32 %v31, %v41
    %v44 = vsub.f32 %v32, %v42
    %v45 = vmul.f32 %v43, %v43
    %v46 = vmul.f32 %v44, %v44
    %v47 = vsel %vm33, %v45, 0.0
    %48 = vadd.xlane.f32.xlu0 %v47
    %v49 = vpop.xlane.xlu0 %48
    %v50 = vsel %vm33, %v46, 0.0
    %51 = vadd.xlane.f32.xlu0 %v50
    %v52 = vpop.xlane.xlu0 %51
    %v53 = vrcp.pop 31.0
    %v54 = vmul.f32 %v49, %v53
    %v55 = vmul.f32 %v52, %v53
    %v56 = vrsqrt.pop %v54
    %v57 = vmul.f32 %v54, %v56
    %vm58 = vcmp.eq.f32.partialorder %v54, inf
    %v59 = vsel %vm58, %v54, %v57
    %vm60 = vcmp.eq.f32.partialorder %v54, 0.0
    %v61 = vand.u32 %v54, 2147483648
    %v62 = vsel %vm60, %v61, %v59
    %v63 = vrsqrt.pop %v55
    %v64 = vmul.f32 %v55, %v63
    %vm65 = vcmp.eq.f32.partialorder %v55, inf
    %v66 = vsel %vm65, %v55, %v64
    %vm67 = vcmp.eq.f32.partialorder %v55, 0.0
    %v68 = vand.u32 %v55, 2147483648
    %v69 = vsel %vm67, %v68, %v66
    %v70 = vadd.f32 %v62, 1e-06
    %v71 = vadd.f32 %v69, 1e-06
    %v72 = vrsqrt.pop %v70
    %v73 = vrsqrt.pop %v71
    %s74 = sld [smem:[#allocation2]]
    %s75 = sld [smem:[#allocation3]]
    %v76 = vmul.f32 %v43, %v72
    %v77 = vmul.f32 %v44, %v73
    %v78 = vstv %s74
    %v79 = vmul.f32 %v78, %v76
    %v80 = vmul.f32 %v78, %v77
    %v81 = vstv %s75
    %v82 = vadd.f32 %v79, %v81
    %v83 = vadd.f32 %v80, %v81
    %84 = vst.msk [vmem:[#allocation7] sm:$0xff] %vm33, %v82
    %85 = vst.msk [vmem:[#allocation7 + $0x8] sm:$0xff] %vm33, %v83
    // Predicated region
    $region18: #{tpu_custom_call.1} parent=1 // pred_check
      _
    $region19: #{tpu_custom_call.1} parent=1 // pred_check_branch
      %87 = sbr.rel (0) target = $region21
    $region20: #{tpu_custom_call.1} parent=1 // pred_region
      %s89 = ssub.s32 256, 256
      %90 = vsyncadd [#allocation6], %s89
      %s91 = sshll.u32 [#allocation7], 4
      %s92 = int_to_ptr.vmem [resolvable:$true] %s91
      %97 = dma.vmem_to_hbm [thread:$0]  %s92, 256, %s3, [#allocation6], 128, 128, 8
    $region21: #{tpu_custom_call.1} parent=1 // pred_fallthru
      _
    // Predicated region
    $region22: #{tpu_custom_call.1} parent=1 // pred_check
      _
    $region23: #{tpu_custom_call.1} parent=1 // pred_check_branch
      %99 = sbr.rel (0) target = $region25
    $region24: #{tpu_custom_call.1} parent=1 // pred_region
      %100 = dma.done [#allocation6], 256
    $region25: #{tpu_custom_call.1} parent=1 // pred_fallthru
      _
    %101 = vsyncpa [#allocation5], 1
    %102 = vsyncpa [#allocation6], 1

</llo_original>
